<compile_context>
chip_gen: v7x
topology: tpu7x:2x2x1
jax: 0.10.0
libtpu: 0.0.40
codegen_flags: <defaults>
</compile_context>

<pallas_src>
import functools

import jax
import jax.numpy as jnp
from jax import lax
from jax.experimental import pallas as pl
from jax.experimental.pallas import tpu as pltpu

_TWO_PI = 6.283185307179586
_LANES = 128
_MAX_BLOCK_ELEMS = 4096 * 128          # 2 MiB per f32 block


def _round_up(x, m):
    return (x + m - 1) // m * m


def _min_tile_rows(dt):
    """Min sublane-tile height for a dtype: f32 -> 8, bf16 -> 16, int8 -> 32."""
    return max(8, 32 // jnp.dtype(dt).itemsize)


def _mix32(x):
    """lowbias32 integer mixer: u32 counter -> well-scrambled u32 bits."""
    x = x ^ (x >> 16)
    x = x * jnp.uint32(0x7FEB352D)
    x = x ^ (x >> 15)
    x = x * jnp.uint32(0x846CA68B)
    x = x ^ (x >> 16)
    return x


def _bits_to_unit_float(bits_u32):
    """u32 random bits -> f32 in [1, 2) via exponent trick (no int->fp convert)."""
    mant = (bits_u32 >> jnp.uint32(9)) | jnp.uint32(0x3F800000)
    return lax.bitcast_convert_type(mant, jnp.float32)


def _gausnoise_kernel(seed_ref, x_ref, o_ref, *, mean, std, clamp, out_dtype,
                      tile_rows, lanes, use_hw_prng):
    half = tile_rows // 2
    tile = pl.program_id(0)            # top-level only (not inside any pl.when)

    if use_hw_prng:
        # Hardware PRNG: essentially free vs ~30 int-ALU ops/pair of the hash.
        # Re-seed per tile so every block gets a unique stream.
        pltpu.prng_seed(seed_ref[0], tile)
        b1 = lax.bitcast_convert_type(
            pltpu.prng_random_bits((half, lanes)), jnp.uint32)
        b2 = lax.bitcast_convert_type(
            pltpu.prng_random_bits((half, lanes)), jnp.uint32)
    else:
        # Portable fallback (interpret / non-TPU backends): counter hash.
        seed = seed_ref[0].astype(jnp.uint32)
        row = lax.broadcasted_iota(jnp.int32, (half, lanes), 0)
        lane = lax.broadcasted_iota(jnp.int32, (half, lanes), 1)
        pair = (tile * half + row) * lanes + lane
        c = pair.astype(jnp.uint32) * jnp.uint32(2)
        b1 = _mix32(c ^ seed)
        b2 = _mix32((c + jnp.uint32(1)) ^ seed)

    u1 = 2.0 - _bits_to_unit_float(b1)         # (0, 1]  -> log-safe
    u2 = _bits_to_unit_float(b2) - 1.0         # [0, 1)

    # Box-Muller, BOTH outputs used (log/sqrt/PRNG paid once per 2 elements).
    r = jnp.sqrt(-2.0 * jnp.log(u1))
    theta = jnp.float32(_TWO_PI) * u2
    cos_t = jnp.cos(theta)
    # |sin| from cos (EUP sqrt) + a spare random sign bit instead of a second
    # trig polynomial on the saturated VALU slot; statistically identical.
    sin_t = jnp.sqrt(jnp.maximum(1.0 - cos_t * cos_t, 0.0))
    sin_t = jnp.where((b2 & jnp.uint32(1)) != jnp.uint32(0), sin_t, -sin_t)

    std_f = jnp.float32(std)
    mean_f = jnp.float32(mean)
    top = x_ref[0:half, :].astype(jnp.float32) + (r * cos_t) * std_f + mean_f
    bot = x_ref[half:tile_rows, :].astype(jnp.float32) + (r * sin_t) * std_f + mean_f
    if clamp:                                   # static module configuration
        lo, hi = jnp.float32(clamp[0]), jnp.float32(clamp[1])
        top = jnp.clip(top, lo, hi)
        bot = jnp.clip(bot, lo, hi)
    # Direct half-block stores (no concatenate -> no extra full-tile VMEM temp).
    o_ref[0:half, :] = top.astype(out_dtype)
    o_ref[half:tile_rows, :] = bot.astype(out_dtype)


def _apply_gausnoise(inp, seed, *, mean, std, clamp, out_dtype):
    orig_shape = inp.shape
    total = inp.size

    # Rows padded so each *half* tile stays sublane-aligned for in/out dtypes.
    row_align = 2 * max(_min_tile_rows(inp.dtype), _min_tile_rows(out_dtype))

    # Lane-dense slab; widen the lane dim for larger inputs (cheaper stores),
    # keep 128 for small ones to limit padding.
    lanes = _LANES
    for cand in (1024, 512, 256):
        if total >= cand * row_align * 4:
            lanes = cand
            break

    padded_total = _round_up(total, row_align * lanes)
    flat = inp.reshape(-1)
    if padded_total != total:
        flat = jnp.pad(flat, (0, padded_total - total))
    rows = padded_total // lanes
    x2d = flat.reshape(rows, lanes)             # native dtype; kernel upcasts

    max_rows = max(row_align, _MAX_BLOCK_ELEMS // lanes)   # <= 2 MiB f32 block
    tile_rows = min(rows, max_rows)
    if tile_rows == rows and rows > row_align:
        # Keep >= 2 grid steps so v7x's second TensorCore gets work.
        tile_rows = _round_up(pl.cdiv(rows, 2), row_align)
    grid = (pl.cdiv(rows, tile_rows),)

    use_hw_prng = jax.default_backend() == "tpu"

    kernel = functools.partial(
        _gausnoise_kernel, mean=mean, std=std, clamp=clamp, out_dtype=out_dtype,
        tile_rows=tile_rows, lanes=lanes, use_hw_prng=use_hw_prng)

    out2d = pl.pallas_call(
        kernel,
        out_shape=jax.ShapeDtypeStruct((rows, lanes), out_dtype),
        grid_spec=pltpu.PrefetchScalarGridSpec(
            num_scalar_prefetch=1,                       # seed (SMEM scalar)
            grid=grid,
            in_specs=[pl.BlockSpec((tile_rows, lanes), lambda i, s: (i, 0))],
            out_specs=pl.BlockSpec((tile_rows, lanes), lambda i, s: (i, 0)),
        ),
        compiler_params=pltpu.CompilerParams(
            dimension_semantics=("parallel",),           # elementwise: shardable
            vmem_limit_bytes=48 * 1024 * 1024),
    )(seed, x2d)

    out = out2d.reshape(-1)
    if padded_total != total:
        out = out[:total]
    return out.reshape(orig_shape)


def gausnoise(inp, key, *, probability=1.0, mean=0.0, std=1.0, clamp=False,
              dtype=jnp.float32):
    """JAX/Pallas equivalent of Gausnoise.forward."""
    out_dtype = jnp.dtype(dtype)
    k_gate, k_seed = jax.random.split(key)
    seed = jax.random.randint(k_seed, (1,), 0, 2 ** 31 - 1, dtype=jnp.int32)

    noisy = functools.partial(_apply_gausnoise, seed=seed, mean=mean, std=std,
                              clamp=clamp, out_dtype=out_dtype)
    identity = lambda x: x.astype(out_dtype)

    # Probability gate hoisted out of the kernel (matches `p > torch.rand(1)`).
    # Static 0/1 probabilities skip the cond entirely; the no-noise path never
    # launches the kernel, so it costs zero HBM bandwidth.
    if probability >= 1.0:
        return noisy(inp)
    if probability <= 0.0:
        return identity(inp)
    gate = jnp.float32(probability) > jax.random.uniform(k_gate, (), jnp.float32)
    return lax.cond(gate, noisy, identity, inp)


if __name__ == "__main__":
    key = jax.random.PRNGKey(0)
    k_data, k_noise = jax.random.split(key)

    # Small NCHW input, consistent with an image-augmentation module.
    x = jax.random.normal(k_data, (2, 4, 16, 16), dtype=jnp.float32)

    # Default module config: probability=1.0, mean=0, std=1.0, clamp=False, f32.
    y = jax.block_until_ready(
        gausnoise(x, k_noise, probability=1.0, mean=0.0, std=1.0,
                  clamp=False, dtype=jnp.float32))
    assert y.shape == x.shape and y.dtype == jnp.float32
    noise = y - x
    assert float(jnp.max(jnp.abs(noise))) > 0.0
    assert abs(float(jnp.mean(noise))) < 0.2
    assert 0.7 < float(jnp.std(noise)) < 1.3

    # Clamp branch.
    y_clamped = jax.block_until_ready(
        gausnoise(x, k_noise, probability=1.0, clamp=(-0.5, 0.5)))
    assert float(jnp.max(y_clamped)) <= 0.5 and float(jnp.min(y_clamped)) >= -0.5

    # probability=0 (identity / cast-only) branch: no kernel launched.
    y_id = jax.block_until_ready(gausnoise(x, k_noise, probability=0.0))
    assert bool(jnp.allclose(y_id, x))

    # Stochastic gate path (lax.cond around the kernel).
    y_p = jax.block_until_ready(gausnoise(x, k_noise, probability=0.5))
    assert y_p.shape == x.shape and y_p.dtype == jnp.float32

    print("KERNEL_OK")
</pallas_src>

<mosaic_0001>
module attributes {stable_mosaic.version = 11 : i64} {
  func.func @_gausnoise_kernel(%arg0: i32, %arg1: memref<1xi32, #tpu.memory_space<smem>>, %arg2: memref<16x128xf32, #tpu.memory_space<vmem>>, %arg3: memref<16x128xf32, #tpu.memory_space<vmem>>) attributes {dimension_semantics = [#tpu.dimension_semantics<parallel>], iteration_bounds = array<i64: 1>, scalar_prefetch = 1 : i64, scratch_operands = 0 : i64, tpu.core_type = #tpu.core_type<tc>, window_params = [{transform_indices = @transform_0, window_bounds = array<i64: 16, 128>}, {transform_indices = @transform_1, window_bounds = array<i64: 16, 128>}]} {
    %c0 = arith.constant 0 : index
    %0 = memref.load %arg1[%c0] : memref<1xi32, #tpu.memory_space<smem>>
    %1 = tpu.iota {dimensions = array<i32: 0>} : vector<8x128xi32>
    %2 = tpu.iota {dimensions = array<i32: 1>} : vector<8x128xi32>
    %c8_i32 = arith.constant 8 : i32
    %3 = arith.muli %arg0, %c8_i32 : i32
    %4 = vector.broadcast %3 : i32 to vector<8x128xi32>
    %5 = arith.addi %4, %1 : vector<8x128xi32>
    %c128_i32 = arith.constant 128 : i32
    %6 = vector.broadcast %c128_i32 : i32 to vector<8x128xi32>
    %7 = arith.muli %5, %6 : vector<8x128xi32>
    %8 = arith.addi %7, %2 : vector<8x128xi32>
    %c2_i32 = arith.constant 2 : i32
    %9 = vector.broadcast %c2_i32 : i32 to vector<8x128xi32>
    %10 = arith.muli %8, %9 : vector<8x128xi32>
    %11 = vector.broadcast %0 : i32 to vector<8x128xi32>
    %12 = arith.xori %10, %11 : vector<8x128xi32>
    %c16_i32 = arith.constant 16 : i32
    %13 = vector.broadcast %c16_i32 : i32 to vector<8x128xi32>
    %14 = arith.shrui %12, %13 : vector<8x128xi32>
    %15 = arith.xori %12, %14 : vector<8x128xi32>
    %c2146121005_i32 = arith.constant 2146121005 : i32
    %16 = vector.broadcast %c2146121005_i32 : i32 to vector<8x128xi32>
    %17 = arith.muli %15, %16 : vector<8x128xi32>
    %c15_i32 = arith.constant 15 : i32
    %18 = vector.broadcast %c15_i32 : i32 to vector<8x128xi32>
    %19 = arith.shrui %17, %18 : vector<8x128xi32>
    %20 = arith.xori %17, %19 : vector<8x128xi32>
    %c-2073254261_i32 = arith.constant -2073254261 : i32
    %21 = vector.broadcast %c-2073254261_i32 : i32 to vector<8x128xi32>
    %22 = arith.muli %20, %21 : vector<8x128xi32>
    %c16_i32_0 = arith.constant 16 : i32
    %23 = vector.broadcast %c16_i32_0 : i32 to vector<8x128xi32>
    %24 = arith.shrui %22, %23 : vector<8x128xi32>
    %25 = arith.xori %22, %24 : vector<8x128xi32>
    %c1_i32 = arith.constant 1 : i32
    %26 = vector.broadcast %c1_i32 : i32 to vector<8x128xi32>
    %27 = arith.addi %10, %26 : vector<8x128xi32>
    %28 = vector.broadcast %0 : i32 to vector<8x128xi32>
    %29 = arith.xori %27, %28 : vector<8x128xi32>
    %c16_i32_1 = arith.constant 16 : i32
    %30 = vector.broadcast %c16_i32_1 : i32 to vector<8x128xi32>
    %31 = arith.shrui %29, %30 : vector<8x128xi32>
    %32 = arith.xori %29, %31 : vector<8x128xi32>
    %c2146121005_i32_2 = arith.constant 2146121005 : i32
    %33 = vector.broadcast %c2146121005_i32_2 : i32 to vector<8x128xi32>
    %34 = arith.muli %32, %33 : vector<8x128xi32>
    %c15_i32_3 = arith.constant 15 : i32
    %35 = vector.broadcast %c15_i32_3 : i32 to vector<8x128xi32>
    %36 = arith.shrui %34, %35 : vector<8x128xi32>
    %37 = arith.xori %34, %36 : vector<8x128xi32>
    %c-2073254261_i32_4 = arith.constant -2073254261 : i32
    %38 = vector.broadcast %c-2073254261_i32_4 : i32 to vector<8x128xi32>
    %39 = arith.muli %37, %38 : vector<8x128xi32>
    %c16_i32_5 = arith.constant 16 : i32
    %40 = vector.broadcast %c16_i32_5 : i32 to vector<8x128xi32>
    %41 = arith.shrui %39, %40 : vector<8x128xi32>
    %42 = arith.xori %39, %41 : vector<8x128xi32>
    %c9_i32 = arith.constant 9 : i32
    %43 = vector.broadcast %c9_i32 : i32 to vector<8x128xi32>
    %44 = arith.shrui %25, %43 : vector<8x128xi32>
    %c1065353216_i32 = arith.constant 1065353216 : i32
    %45 = vector.broadcast %c1065353216_i32 : i32 to vector<8x128xi32>
    %46 = arith.ori %44, %45 : vector<8x128xi32>
    %47 = tpu.bitcast %46 : vector<8x128xi32> -> vector<8x128xf32>
    %cst = arith.constant 2.000000e+00 : f32
    %48 = vector.broadcast %cst : f32 to vector<8x128xf32>
    %49 = arith.subf %48, %47 : vector<8x128xf32>
    %c9_i32_6 = arith.constant 9 : i32
    %50 = vector.broadcast %c9_i32_6 : i32 to vector<8x128xi32>
    %51 = arith.shrui %42, %50 : vector<8x128xi32>
    %c1065353216_i32_7 = arith.constant 1065353216 : i32
    %52 = vector.broadcast %c1065353216_i32_7 : i32 to vector<8x128xi32>
    %53 = arith.ori %51, %52 : vector<8x128xi32>
    %54 = tpu.bitcast %53 : vector<8x128xi32> -> vector<8x128xf32>
    %cst_8 = arith.constant 1.000000e+00 : f32
    %55 = vector.broadcast %cst_8 : f32 to vector<8x128xf32>
    %56 = arith.subf %54, %55 : vector<8x128xf32>
    %57 = math.log %49 : vector<8x128xf32>
    %cst_9 = arith.constant -2.000000e+00 : f32
    %58 = vector.broadcast %cst_9 : f32 to vector<8x128xf32>
    %59 = arith.mulf %58, %57 : vector<8x128xf32>
    %60 = math.sqrt %59 : vector<8x128xf32>
    %cst_10 = arith.constant 6.28318548 : f32
    %61 = vector.broadcast %cst_10 : f32 to vector<8x128xf32>
    %62 = arith.mulf %61, %56 : vector<8x128xf32>
    %63 = math.cos %62 : vector<8x128xf32>
    %64 = arith.mulf %63, %63 : vector<8x128xf32>
    %cst_11 = arith.constant 1.000000e+00 : f32
    %65 = vector.broadcast %cst_11 : f32 to vector<8x128xf32>
    %66 = arith.subf %65, %64 : vector<8x128xf32>
    %cst_12 = arith.constant 0.000000e+00 : f32
    %67 = vector.broadcast %cst_12 : f32 to vector<8x128xf32>
    %68 = arith.maximumf %66, %67 : vector<8x128xf32>
    %69 = math.sqrt %68 : vector<8x128xf32>
    %c1_i32_13 = arith.constant 1 : i32
    %70 = vector.broadcast %c1_i32_13 : i32 to vector<8x128xi32>
    %71 = arith.andi %42, %70 : vector<8x128xi32>
    %c0_i32 = arith.constant 0 : i32
    %72 = vector.broadcast %c0_i32 : i32 to vector<8x128xi32>
    %73 = arith.cmpi ne, %71, %72 : vector<8x128xi32>
    %cst_14 = arith.constant 0.000000e+00 : f32
    %74 = vector.broadcast %cst_14 : f32 to vector<8x128xf32>
    %75 = arith.subf %74, %69 : vector<8x128xf32>
    %76 = arith.select %73, %69, %75 : vector<8x128xi1>, vector<8x128xf32>
    %c0_15 = arith.constant 0 : index
    %c0_16 = arith.constant 0 : index
    %77 = vector.load %arg2[%c0_15, %c0_16] : memref<16x128xf32, #tpu.memory_space<vmem>>, vector<8x128xf32>
    %78 = arith.mulf %60, %63 : vector<8x128xf32>
    %cst_17 = arith.constant 1.000000e+00 : f32
    %79 = vector.broadcast %cst_17 : f32 to vector<8x128xf32>
    %80 = arith.mulf %78, %79 : vector<8x128xf32>
    %81 = arith.addf %77, %80 : vector<8x128xf32>
    %cst_18 = arith.constant 0.000000e+00 : f32
    %82 = vector.broadcast %cst_18 : f32 to vector<8x128xf32>
    %83 = arith.addf %81, %82 : vector<8x128xf32>
    %c8 = arith.constant 8 : index
    %c0_19 = arith.constant 0 : index
    %84 = vector.load %arg2[%c8, %c0_19] : memref<16x128xf32, #tpu.memory_space<vmem>>, vector<8x128xf32>
    %85 = arith.mulf %60, %76 : vector<8x128xf32>
    %cst_20 = arith.constant 1.000000e+00 : f32
    %86 = vector.broadcast %cst_20 : f32 to vector<8x128xf32>
    %87 = arith.mulf %85, %86 : vector<8x128xf32>
    %88 = arith.addf %84, %87 : vector<8x128xf32>
    %cst_21 = arith.constant 0.000000e+00 : f32
    %89 = vector.broadcast %cst_21 : f32 to vector<8x128xf32>
    %90 = arith.addf %88, %89 : vector<8x128xf32>
    %c0_22 = arith.constant 0 : index
    %c0_23 = arith.constant 0 : index
    %91 = vector.load %arg3[%c0_22, %c0_23] : memref<16x128xf32, #tpu.memory_space<vmem>>, vector<8x128xf32>
    tpu.vector_store %arg3[%c0_22, %c0_23], %83 {strides = array<i32>} : memref<16x128xf32, #tpu.memory_space<vmem>>, vector<8x128xf32>,
    %c8_24 = arith.constant 8 : index
    %c0_25 = arith.constant 0 : index
    %92 = vector.load %arg3[%c8_24, %c0_25] : memref<16x128xf32, #tpu.memory_space<vmem>>, vector<8x128xf32>
    tpu.vector_store %arg3[%c8_24, %c0_25], %90 {strides = array<i32>} : memref<16x128xf32, #tpu.memory_space<vmem>>, vector<8x128xf32>,
    return
  }
  func.func @transform_0(%arg0: i32, %arg1: memref<1xi32, #tpu.memory_space<smem>>) -> (i32, i32) {
    %c0_i32 = arith.constant 0 : i32
    %c0_i32_0 = arith.constant 0 : i32
    return %arg0, %c0_i32 : i32, i32
  }
  func.func @transform_1(%arg0: i32, %arg1: memref<1xi32, #tpu.memory_space<smem>>) -> (i32, i32) {
    %c0_i32 = arith.constant 0 : i32
    %c0_i32_0 = arith.constant 0 : i32
    return %arg0, %c0_i32 : i32, i32
  }
}

</mosaic_0001>

<llo_original>
// kernel: tpu_custom_call.1
$region0: #{tpu_custom_call.1}
  #allocation0 [shape = 'u32[]', space=smem, size = 0x4, offset = 0x4, fixed_abs, tag = 'smem constant byte address 0x4 - core index']
  #allocation1 [shape = 'u32[144,128]{1,0:T(1,128)}', space=vmem, size = 0x12000, scoped, tag = 'internal scratch']
  #allocation2 [shape = 's32[1]{0}', space=sflag, size = 0x4, scoped, tag = 'scoped memory for tpu_custom_call.1']
  #allocation3 [shape = 's32[1]{0:T(128)S(6)}', space=smem, size = 0x200, scoped, tag = 'prefetched SMEM operand 0']
  %s0 = inlined_call_operand.<no memory space> [shape: s32[1], index: 0, kind: input, shape index: {}]
  %s1 = inlined_call_operand.hbm [shape: f32[16,128], index: 1, kind: input, shape index: {}]
  %s2 = inlined_call_operand.hbm [shape: f32[16,128], index: 2, kind: output, shape index: {}]
  %s3 = sld [smem:[#allocation0]]
  $region18: #{tpu_custom_call.1} parent=0
    _
  %s5 = ssub.s32 1, %s3
  %s6 = scalar_select 0, %s5, %s3
  %7 = sst [smem:[#allocation3]] %s0
  $region1: #{tpu_custom_call.1} parent=0
    #allocation4 [shape = 'u8[8192]{0}', space=vmem, size = 0x2000, scoped, tag = 'input window, operand 1, single buffered']
    #allocation5 [shape = 's32[1]{0}', space=sflag, size = 0x4, scoped, tag = 'scoped memory for tpu_custom_call.1']
    #allocation6 [shape = 's32[1]{0}', space=sflag, size = 0x4, scoped, tag = 'scoped memory for tpu_custom_call.1']
    #allocation7 [shape = 'u8[8192]{0}', space=vmem, size = 0x2000, scoped, tag = 'output window, operand 0, single buffered']
    %8 = vsyncpa [#allocation5], 0
    %9 = vsyncpa [#allocation6], 0
    // Predicated region
    $region2: #{tpu_custom_call.1} parent=1 // pred_check
      _
    $region3: #{tpu_custom_call.1} parent=1 // pred_check_branch
      %11 = sbr.rel (0) target = $region5
    $region4: #{tpu_custom_call.1} parent=1 // pred_region
      %s13 = ssub.s32 256, 256
      %14 = vsyncadd [#allocation5], %s13
      %s15 = sshll.u32 [#allocation4], 4
      %s16 = int_to_ptr.vmem [resolvable:$true] %s15
      %21 = dma.hbm_to_vmem [thread:$0]  %s1, 256, %s16, [#allocation5], 128, 128, 8
    $region5: #{tpu_custom_call.1} parent=1 // pred_fallthru
      _
    // Predicated region
    $region6: #{tpu_custom_call.1} parent=1 // pred_check
      _
    $region7: #{tpu_custom_call.1} parent=1 // pred_check_branch
      %23 = sbr.rel (0) target = $region9
    $region8: #{tpu_custom_call.1} parent=1 // pred_region
      %24 = dma.done [#allocation5], 256
    $region9: #{tpu_custom_call.1} parent=1 // pred_fallthru
      _
    %s25 = sld [smem:[#allocation3]]
    %v26 = vlaneseq
    %v27 = vshrl.u32 %v26, 7
    %v28 = vlaneseq
    %v29 = vand.u32 %v28, 127
    %s30 = smul.u32 0, 8
    %v31 = vstv %s30
    %v32 = vadd.s32 %v31, %v27
    %v33 = vmul.u32 %v32, 128
    %v34 = vadd.s32 %v33, %v29
    %v35 = vmul.u32 %v34, 2
    %v36 = vstv %s25
    %v37 = vxor.u32 %v35, %v36
    %v38 = vshrl.u32 %v37, 16
    %v39 = vxor.u32 %v37, %v38
    %v40 = vmul.u32 %v39, 2146121005
    %v41 = vshrl.u32 %v40, 15
    %v42 = vxor.u32 %v40, %v41
    %v43 = vmul.u32 %v42, 2221713035
    %v44 = vshrl.u32 %v43, 16
    %v45 = vxor.u32 %v43, %v44
    %v46 = vadd.s32 %v35, 1
    %v47 = vxor.u32 %v46, %v36
    %v48 = vshrl.u32 %v47, 16
    %v49 = vxor.u32 %v47, %v48
    %v50 = vmul.u32 %v49, 2146121005
    %v51 = vshrl.u32 %v50, 15
    %v52 = vxor.u32 %v50, %v51
    %v53 = vmul.u32 %v52, 2221713035
    %v54 = vshrl.u32 %v53, 16
    %v55 = vxor.u32 %v53, %v54
    %v56 = vshrl.u32 %v45, 9
    %v57 = vor.u32 %v56, 1065353216
    %v59 = vsub.f32 2.0, %v57
    %v60 = vshrl.u32 %v55, 9
    %v61 = vor.u32 %v60, 1065353216
    %v63 = vsub.f32 %v61, 1.0
    %v64 = vlog2.pop %v59
    %v65 = vmul.f32 %v64, 0.6931472
    %v66 = vmul.f32 %v65, -2.0
    %v67 = vrsqrt.pop %v66
    %v68 = vmul.f32 %v66, %v67
    %vm69 = vcmp.eq.f32.partialorder %v66, inf
    %v70 = vsel %vm69, %v66, %v68
    %vm71 = vcmp.eq.f32.partialorder %v66, 0.0
    %v72 = vand.u32 %v66, 2147483648
    %v73 = vsel %vm71, %v72, %v70
    %v74 = vmul.f32 %v63, 6.2831855
    %v75 = vand.u32 2147483647, %v74
    %vm76 = vcmp.le.f32.partialorder %v75, 0.7853982
    %vm77 = vcmp.lt.s32.totalorder %v74, 0
    %v78 = vand.u32 %v74, 2139095040
    %v79 = vshrl.u32 %v78, 23
    %v80 = vsub.s32 %v79, 127
    %v81 = vand.u32 2147483647, %v74
    %v82 = vand.u32 %v81, 8388607
    %v83 = vor.u32 %v82, 8388608
    %v84 = vsub.s32 0, %v83
    %v85 = vadd.s32 %v80, 1
    %vm86 = vcmp.gt.s32.totalorder %v85, 0
    %v87 = vsel %vm86, %v85, 0
    %v88 = vshrl.u32 %v87, 5
    %v89 = vand.u32 %v87, 31
    %v90 = vsub.s32 32, %v89
    %v91 = vshrl.u32 683565275, %v90
    %v92 = vshll.u32 683565275, %v89
    %v93 = vshrl.u32 2475754826, %v90
    %v94 = vor.u32 %v92, %v93
    %v95 = vshll.u32 2475754826, %v89
    %v96 = vshrl.u32 2131351028, %v90
    %v97 = vor.u32 %v95, %v96
    %v98 = vshll.u32 2131351028, %v89
    %v99 = vshrl.u32 2102212464, %v90
    %v100 = vor.u32 %v98, %v99
    %v101 = vshll.u32 2102212464, %v89
    %v102 = vshrl.u32 920167782, %v90
    %v103 = vor.u32 %v101, %v102
    %v104 = vshll.u32 920167782, %v89
    %v105 = vshrl.u32 1326507024, %v90
    %v106 = vor.u32 %v104, %v105
    %vm107 = vcmp.lt.s32.totalorder %v88, 1
    %vm108 = vcmp.lt.s32.totalorder %v88, 2
    %vm109 = vcmp.lt.s32.totalorder %v88, 3
    %vm110 = vcmp.lt.s32.totalorder %v88, 4
    %v111 = vsel %vm107, %v91, %v94
    %v112 = vsel %vm110, %v100, 2102212464
    %v113 = vsel %vm109, %v97, %v112
    %v114 = vsel %vm108, %v111, %v113
    %v115 = vsel %vm107, %v94, %v97
    %v116 = vsel %vm110, %v103, 920167782
    %v117 = vsel %vm109, %v100, %v116
    %v118 = vsel %vm108, %v115, %v117
    %v119 = vsel %vm107, %v97, %v100
    %v120 = vsel %vm110, %v106, 1326507024
    %v121 = vsel %vm109, %v103, %v120
    %v122 = vsel %vm108, %v119, %v121
    %v123 = vshll.u32 %v83, 8
    %v124 = vmul.u32.u64.compose %v123, %v122
    %v125 = vextract.low.u32 %v124
    %v126 = vextract.high.u32 %v124
    %v127 = vmul.u32.u64.compose %v123, %v118
    %v128 = vextract.low.u32 %v127
    %v129 = vextract.high.u32 %v127
    %v130 = vmul.u32 %v123, %v114
    %v131 = vadd.s32 %v126, %v128
    %vm132 = vc.u32 %v126, %v128
    %v133 = vadd.s32 %v129, 1
    %v134 = vsel %vm132, %v133, %v129
    %v135 = vadd.s32 %v130, %v134
    %v136 = vadd.s32 %v135, 536870912
    %v137 = vshrl.u32 %v136, 30
    %v138 = vshll.u32 %v137, 30
    %v139 = vsub.s32 %v135, %v138
    %vm140 = vcmp.lt.s32.totalorder %v139, 0
    %v141 = vsub.s32 0, %v139
    %v142 = vsel %vm140, %v141, %v139
    %v143 = vclz %v142
    %v144 = vsub.s32 %v143, 2
    %vm145 = vcmp.gt.s32.totalorder 0, %v144
    %v146 = vsel %vm145, 0, %v144
    %v147 = vsub.s32 32, %v146
    %v148 = vshll.u32 %v139, %v146
    %v149 = vshrl.u32 %v131, %v147
    %v150 = vor.u32 %v148, %v149
    %v151 = vsub.s32 4294967266, %v146
    %v152 = vadd.s32 %v151, 127
    %v153 = vshll.u32 %v152, 23
    %v154 = vor.u32 4788187, %v153
    %v155 = vand.u32 2147483647, %v154
    %v157 = vcvt.s32.f32 %v150
    %v158 = vmul.f32 %v157, %v155
    %v159 = vxor.u32 %v158, 2147483648
    %v160 = vsel %vm77, %v159, %v158
    %v161 = vsub.s32 4, %v137
    %v162 = vsel %vm77, %v161, %v137
    %v163 = vsel %vm76, %v74, %v160
    %v164 = vsel %vm76, 0, %v162
    %v165 = vcosq.f32.pop %v163
    %v166 = vsinq.f32.pop %v163
    %vm167 = vweird.f32 %v74
    %v168 = vand.u32 %v164, 3
    %vm169 = vcmp.lt.s32.totalorder %v168, 2
    %vm170 = vcmp.eq.s32.totalorder %v168, 0
    %v171 = vxor.u32 %v166, 2147483648
    %v172 = vsel %vm170, %v165, %v171
    %vm173 = vcmp.eq.s32.totalorder %v168, 2
    %v174 = vxor.u32 %v165, 2147483648
    %v175 = vsel %vm173, %v174, %v166
    %v176 = vsel %vm169, %v172, %v175
    %v177 = vsel %vm167, nan, %v176
    %v178 = vmul.f32 %v177, %v177
    %v179 = vsub.f32 1.0, %v178
    %v180 = vmax.f32 %v179, 0.0
    %v181 = vrsqrt.pop %v180
    %v182 = vmul.f32 %v180, %v181
    %vm183 = vcmp.eq.f32.partialorder %v180, inf
    %v184 = vsel %vm183, %v180, %v182
    %vm185 = vcmp.eq.f32.partialorder %v180, 0.0
    %v186 = vand.u32 %v180, 2147483648
    %v187 = vsel %vm185, %v186, %v184
    %v188 = vand.u32 %v55, 1
    %vm189 = vcmp.ne.s32.totalorder %v188, 0
    %v190 = vsub.f32 0.0, %v187
    %v191 = vsel %vm189, %v187, %v190
    %v192 = vld [vmem:[#allocation4] sm:$0xff]
    %v193 = vmul.f32 %v73, %v177
    %v194 = vadd.f32 %v192, %v193
    %v195 = vadd.f32 %v194, 0.0
    %v196 = vld [vmem:[#allocation4 + $0x8] sm:$0xff]
    %v197 = vmul.f32 %v73, %v191
    %v198 = vadd.f32 %v196, %v197
    %v199 = vadd.f32 %v198, 0.0
    %200 = vst [vmem:[#allocation7] sm:$0xff] %v195
    %201 = vst [vmem:[#allocation7 + $0x8] sm:$0xff] %v199
    // Predicated region
    $region10: #{tpu_custom_call.1} parent=1 // pred_check
      _
    $region11: #{tpu_custom_call.1} parent=1 // pred_check_branch
      %203 = sbr.rel (0) target = $region13
    $region12: #{tpu_custom_call.1} parent=1 // pred_region
      %s205 = ssub.s32 256, 256
      %206 = vsyncadd [#allocation6], %s205
      %s207 = sshll.u32 [#allocation7], 4
      %s208 = int_to_ptr.vmem [resolvable:$true] %s207
      %213 = dma.vmem_to_hbm [thread:$0]  %s208, 256, %s2, [#allocation6], 128, 128, 8
    $region13: #{tpu_custom_call.1} parent=1 // pred_fallthru
      _
    // Predicated region
    $region14: #{tpu_custom_call.1} parent=1 // pred_check
      _
    $region15: #{tpu_custom_call.1} parent=1 // pred_check_branch
      %215 = sbr.rel (0) target = $region17
    $region16: #{tpu_custom_call.1} parent=1 // pred_region
      %216 = dma.done [#allocation6], 256
    $region17: #{tpu_custom_call.1} parent=1 // pred_fallthru
      _
    %217 = vsyncpa [#allocation5], 1
    %218 = vsyncpa [#allocation6], 1

</llo_original>
